<compile_context>
chip_gen: v6e
topology: v6e:2x2x1
jax: 0.10.0
libtpu: 0.0.40
codegen_flags: <defaults>
</compile_context>

<pallas_src>
import jax
import jax.numpy as jnp
from jax import lax
from jax.experimental import pallas as pl
from jax.experimental.pallas import tpu as pltpu

_CHUNK_BATCH = 256           # batch rows per inner (fori_loop) step
_DEFAULT_TILE_BATCH = 32768  # batch rows per grid step (review: sweep 16K-64K)


def _round_up(n, m):
    return ((n + m - 1) // m) * m


def _make_kernel(chunk_rows, n_chunks):
    def kernel(x_ref, w1_ref, b1_ref, w2_ref, b2_ref, w3_ref, b3_ref, o_ref):
        # Weights/biases are tiny constant blocks (index_map == (0, 0)) so they stay
        # VMEM-resident across grid steps; load them once per step, hoisted out of
        # the chunk loop so unrolled iterations don't re-emit loads/broadcasts.
        w1 = w1_ref[...]          # [P*in,  P*64] bf16   block-diag kron(I_P, w1^T)
        w2 = w2_ref[...]          # [P*64,  P*32] bf16   block-diag kron(I_P, w2^T)
        w3 = w3_ref[...]          # [P*32,  P]    f32    block-diag kron(I_P, w3^T)
        b1 = b1_ref[...]          # [1, P*64] f32 (sublane-broadcast in the add)
        b2 = b2_ref[...]          # [1, P*32] f32
        b3 = b3_ref[...]          # [1, P]    f32

        def chunk(c, carry):
            r0 = pl.multiple_of(c * chunk_rows, chunk_rows)
            xc = x_ref[pl.ds(r0, chunk_rows), :].astype(jnp.bfloat16)      # [rows, P*in]
            # fc1 + ReLU (MXU bf16, f32 accumulate)
            h1 = jnp.dot(xc, w1, preferred_element_type=jnp.float32)       # [rows, P*64]
            h1 = jnp.maximum(h1 + b1, 0.0).astype(jnp.bfloat16)
            # fc2 + ReLU
            h2 = jnp.dot(h1, w2, preferred_element_type=jnp.float32)       # [rows, P*32]
            h2 = jnp.maximum(h2 + b2, 0.0)
            # fc3 + sigmoid, fully in f32 (exact reciprocal; we are not EUP/VALU bound).
            z = jnp.dot(h2, w3, preferred_element_type=jnp.float32) + b3   # [rows, P]
            o_ref[pl.ds(r0, chunk_rows), :] = 1.0 / (1.0 + jnp.exp(-z))
            return carry

        # Modest unroll (review): keeps vreg live ranges bounded vs. a full unroll.
        lax.fori_loop(0, n_chunks, chunk, 0, unroll=min(4, n_chunks))

    return kernel


def feed_forward_nn(x, w1, b1, w2, b2, w3, b3, *, tile_batch=_DEFAULT_TILE_BATCH):
    """Forward pass of FeedForwardNN: sigmoid(fc3(relu(fc2(relu(fc1(x)))))).

    x:  [B, input_size] f32
    w1: [64, input_size], b1: [64]   (PyTorch nn.Linear layout)
    w2: [32, 64],         b2: [32]
    w3: [1, 32],          b3: [1]
    Returns [B, 1] f32.
    """
    B, in_size = x.shape
    h1d, h2d, od = w1.shape[0], w2.shape[0], w3.shape[0]
    assert od == 1, "FeedForwardNN's fc3 has a single output unit"

    # Lane packing factor: P batch rows share the 128-lane axis when P*in_size == 128.
    P = 128 // in_size if (in_size <= 128 and 128 % in_size == 0) else 1

    # Batch padding only happens when B is not a multiple of P (or B is tiny); the
    # perf-relevant large-B path reaches the kernel with zero extra HBM passes.
    B_pad = max(_round_up(B, P), 8 * P)
    xp = x if B_pad == B else jnp.pad(x, ((0, B_pad - B), (0, 0)))
    R = B_pad // P
    xp = xp.reshape(R, P * in_size)       # free row-major view (no data movement)

    # --- Tiling ----------------------------------------------------------------
    chunk_rows = max(8, _CHUNK_BATCH // P)          # packed rows per inner step
    if R <= chunk_rows:
        chunk_rows = R                              # single chunk == full array
    # Cap from the requested batch tile.
    tile_rows_cap = max(chunk_rows,
                        (max(tile_batch, 1) // P) // chunk_rows * chunk_rows)
    # Keep >= ~8 grid steps when B is large (pipelining + v7x megacore sharding).
    rows_for_8_steps = _round_up(pl.cdiv(R, 8), chunk_rows)
    # Generation-safe VMEM cap: ~4 MiB per (x + out) pipeline buffer, x2 for double
    # buffering, + <1 MiB of resident weights -> fits v5e 16 MiB and v6e/v7x 32 MiB
    # default scoped VMEM, so no vmem_limit_bytes override is needed.
    bytes_per_row = P * in_size * 4 + 512
    tile_rows_mem = max(chunk_rows,
                        ((4 << 20) // bytes_per_row) // chunk_rows * chunk_rows)
    tile_rows = max(chunk_rows, min(tile_rows_cap, rows_for_8_steps, tile_rows_mem))
    n_chunks = tile_rows // chunk_rows
    grid = (pl.cdiv(R, tile_rows),)

    # --- Packed (block-diagonal) weights: built once from the tiny fc weights ----
    eye_p = jnp.eye(P, dtype=jnp.float32)
    w1b = jnp.kron(eye_p, w1.T.astype(jnp.float32)).astype(jnp.bfloat16)  # [P*in, P*64]
    w2b = jnp.kron(eye_p, w2.T.astype(jnp.float32)).astype(jnp.bfloat16)  # [P*64, P*32]
    w3b = jnp.kron(eye_p, w3.T.astype(jnp.float32))                        # [P*32, P] f32
    b1t = jnp.tile(b1.astype(jnp.float32), P).reshape(1, P * h1d)
    b2t = jnp.tile(b2.astype(jnp.float32), P).reshape(1, P * h2d)
    b3t = jnp.tile(b3.astype(jnp.float32), P).reshape(1, P)

    const = lambda i: (0, 0)
    out = pl.pallas_call(
        _make_kernel(chunk_rows, n_chunks),
        out_shape=jax.ShapeDtypeStruct((R, P), jnp.float32),
        grid=grid,
        in_specs=[
            # Streamed, lane-dense x tile.  (If profiling ever shows exposed DMA,
            # add pipeline_mode=pl.Buffered(3) to this spec only.)
            pl.BlockSpec((tile_rows, P * in_size), lambda i: (i, 0)),
            pl.BlockSpec(w1b.shape, const),        # weights stay VMEM-resident
            pl.BlockSpec(b1t.shape, const),
            pl.BlockSpec(w2b.shape, const),
            pl.BlockSpec(b2t.shape, const),
            pl.BlockSpec(w3b.shape, const),
            pl.BlockSpec(b3t.shape, const),
        ],
        out_specs=pl.BlockSpec((tile_rows, P), lambda i: (i, 0)),
        compiler_params=pltpu.CompilerParams(
            dimension_semantics=("parallel",),     # batch grid: megacore-shardable
        ),
    )(xp, w1b, b1t, w2b, b2t, w3b, b3t)

    # [R, P] -> [B_pad] is a free row-major view; then drop any pad rows.
    return out.reshape(B_pad)[:B].reshape(B, 1)


def init_params(key, input_size):
    """nn.Linear-style init (uniform(+-1/sqrt(fan_in))), PyTorch weight layout."""
    dims = [(input_size, 64), (64, 32), (32, 1)]
    params = []
    for i, (fan_in, fan_out) in enumerate(dims):
        kw, kb = jax.random.split(jax.random.fold_in(key, i))
        bound = 1.0 / jnp.sqrt(jnp.float32(fan_in))
        w = jax.random.uniform(kw, (fan_out, fan_in), jnp.float32, -bound, bound)
        b = jax.random.uniform(kb, (fan_out,), jnp.float32, -bound, bound)
        params += [w, b]
    return params


def reference(x, w1, b1, w2, b2, w3, b3):
    h1 = jnp.maximum(x @ w1.T + b1, 0.0)
    h2 = jnp.maximum(h1 @ w2.T + b2, 0.0)
    return jax.nn.sigmoid(h2 @ w3.T + b3)


if __name__ == "__main__":
    key = jax.random.PRNGKey(0)
    input_size = 16
    kx, kp = jax.random.split(key)
    params = init_params(kp, input_size)

    fwd = jax.jit(feed_forward_nn)

    # batch=8: tiny single block; 600: multi-step grid with a partial final block;
    # 250: exercises the (rare) batch-padding fallback (250 % 8 != 0).
    for i, batch in enumerate((8, 600, 250)):
        x = jax.random.normal(jax.random.fold_in(kx, i),
                              (batch, input_size), jnp.float32)
        out = jax.block_until_ready(fwd(x, *params))
        ref = reference(x, *params)
        assert out.shape == (batch, 1), out.shape
        err = float(jnp.max(jnp.abs(out - ref)))
        # bf16 MXU operands for fc1/fc2 -> relaxed tolerance vs the f32 reference.
        assert err < 2e-2, err

    print("KERNEL_OK")
</pallas_src>

<mosaic_0001>
module attributes {stable_mosaic.version = 11 : i64} {
  func.func @kernel(%arg0: i32, %arg1: memref<8x128xf32, #tpu.memory_space<vmem>>, %arg2: memref<128x512xbf16, #tpu.memory_space<vmem>>, %arg3: memref<1x512xf32, #tpu.memory_space<vmem>>, %arg4: memref<512x256xbf16, #tpu.memory_space<vmem>>, %arg5: memref<1x256xf32, #tpu.memory_space<vmem>>, %arg6: memref<256x8xf32, #tpu.memory_space<vmem>>, %arg7: memref<1x8xf32, #tpu.memory_space<vmem>>, %arg8: memref<8x8xf32, #tpu.memory_space<vmem>>) attributes {dimension_semantics = [#tpu.dimension_semantics<parallel>], iteration_bounds = array<i64: 1>, scalar_prefetch = 0 : i64, scratch_operands = 0 : i64, tpu.core_type = #tpu.core_type<tc>, window_params = [{transform_indices = @transform_0, window_bounds = array<i64: 8, 128>}, {pipeline_mode = #tpu.pipeline_mode<synchronous>, transform_indices = @transform_1, window_bounds = array<i64: 128, 512>}, {pipeline_mode = #tpu.pipeline_mode<synchronous>, transform_indices = @transform_2, window_bounds = array<i64: 1, 512>}, {pipeline_mode = #tpu.pipeline_mode<synchronous>, transform_indices = @transform_3, window_bounds = array<i64: 512, 256>}, {pipeline_mode = #tpu.pipeline_mode<synchronous>, transform_indices = @transform_4, window_bounds = array<i64: 1, 256>}, {pipeline_mode = #tpu.pipeline_mode<synchronous>, transform_indices = @transform_5, window_bounds = array<i64: 256, 8>}, {pipeline_mode = #tpu.pipeline_mode<synchronous>, transform_indices = @transform_6, window_bounds = array<i64: 1, 8>}, {transform_indices = @transform_7, window_bounds = array<i64: 8, 8>}]} {
    %c0 = arith.constant 0 : index
    %c0_0 = arith.constant 0 : index
    %0 = vector.load %arg2[%c0, %c0_0] : memref<128x512xbf16, #tpu.memory_space<vmem>>, vector<128x512xbf16>
    %c0_1 = arith.constant 0 : index
    %c0_2 = arith.constant 0 : index
    %1 = vector.load %arg4[%c0_1, %c0_2] : memref<512x256xbf16, #tpu.memory_space<vmem>>, vector<512x256xbf16>
    %c0_3 = arith.constant 0 : index
    %c0_4 = arith.constant 0 : index
    %2 = vector.load %arg6[%c0_3, %c0_4] : memref<256x8xf32, #tpu.memory_space<vmem>>, vector<256x8xf32>
    %c0_5 = arith.constant 0 : index
    %c0_6 = arith.constant 0 : index
    %3 = vector.load %arg3[%c0_5, %c0_6] : memref<1x512xf32, #tpu.memory_space<vmem>>, vector<1x512xf32>
    %c0_7 = arith.constant 0 : index
    %c0_8 = arith.constant 0 : index
    %4 = vector.load %arg5[%c0_7, %c0_8] : memref<1x256xf32, #tpu.memory_space<vmem>>, vector<1x256xf32>
    %c0_9 = arith.constant 0 : index
    %c0_10 = arith.constant 0 : index
    %5 = vector.load %arg7[%c0_9, %c0_10] : memref<1x8xf32, #tpu.memory_space<vmem>>, vector<1x8xf32>
    %c0_i32 = arith.constant 0 : i32
    %c8_i32 = arith.constant 8 : i32
    %6 = arith.muli %c0_i32, %c8_i32 : i32
    %7 = tpu.assume_multiple %6, 8 : i32
    %8 = arith.index_cast %7 : i32 to index
    %c0_11 = arith.constant 0 : index
    %9 = vector.load %arg1[%8, %c0_11] : memref<8x128xf32, #tpu.memory_space<vmem>>, vector<8x128xf32>
    %10 = arith.truncf %9 : vector<8x128xf32> to vector<8x128xbf16>
    %cst = arith.constant dense<0.000000e+00> : vector<8x512xf32>
    %11 = tpu.matmul %10, %0, %cst {dimension_numbers = #tpu.dot_dimension_numbers<[1], [0], [0], [1], [0, 0, 1, 1], [], []>} : vector<8x128xbf16>, vector<128x512xbf16>, vector<8x512xf32> -> vector<8x512xf32>
    %12 = vector.broadcast %3 : vector<1x512xf32> to vector<8x512xf32>
    %13 = arith.addf %11, %12 : vector<8x512xf32>
    %cst_12 = arith.constant 0.000000e+00 : f32
    %14 = vector.broadcast %cst_12 : f32 to vector<8x512xf32>
    %15 = arith.maximumf %13, %14 : vector<8x512xf32>
    %16 = arith.truncf %15 : vector<8x512xf32> to vector<8x512xbf16>
    %cst_13 = arith.constant dense<0.000000e+00> : vector<8x256xf32>
    %17 = tpu.matmul %16, %1, %cst_13 {dimension_numbers = #tpu.dot_dimension_numbers<[1], [0], [0], [1], [0, 0, 1, 1], [], []>} : vector<8x512xbf16>, vector<512x256xbf16>, vector<8x256xf32> -> vector<8x256xf32>
    %18 = vector.broadcast %4 : vector<1x256xf32> to vector<8x256xf32>
    %19 = arith.addf %17, %18 : vector<8x256xf32>
    %cst_14 = arith.constant 0.000000e+00 : f32
    %20 = vector.broadcast %cst_14 : f32 to vector<8x256xf32>
    %21 = arith.maximumf %19, %20 : vector<8x256xf32>
    %cst_15 = arith.constant dense<0.000000e+00> : vector<8x8xf32>
    %22 = tpu.matmul %21, %2, %cst_15 {dimension_numbers = #tpu.dot_dimension_numbers<[1], [0], [0], [1], [0, 0, 1, 1], [], []>} : vector<8x256xf32>, vector<256x8xf32>, vector<8x8xf32> -> vector<8x8xf32>
    %23 = vector.broadcast %5 : vector<1x8xf32> to vector<8x8xf32>
    %24 = arith.addf %22, %23 : vector<8x8xf32>
    %cst_16 = arith.constant 0.000000e+00 : f32
    %25 = vector.broadcast %cst_16 : f32 to vector<8x8xf32>
    %26 = arith.subf %25, %24 : vector<8x8xf32>
    %27 = math.exp %26 : vector<8x8xf32>
    %cst_17 = arith.constant 1.000000e+00 : f32
    %28 = vector.broadcast %cst_17 : f32 to vector<8x8xf32>
    %29 = arith.addf %28, %27 : vector<8x8xf32>
    %cst_18 = arith.constant 1.000000e+00 : f32
    %30 = vector.broadcast %cst_18 : f32 to vector<8x8xf32>
    %31 = arith.divf %30, %29 : vector<8x8xf32>
    %32 = arith.index_cast %7 : i32 to index
    %c0_19 = arith.constant 0 : index
    %33 = vector.load %arg8[%32, %c0_19] : memref<8x8xf32, #tpu.memory_space<vmem>>, vector<8x8xf32>
    tpu.vector_store %arg8[%32, %c0_19], %31 {strides = array<i32>} : memref<8x8xf32, #tpu.memory_space<vmem>>, vector<8x8xf32>,
    %c1_i32 = arith.constant 1 : i32
    return
  }
  func.func @transform_0(%arg0: i32) -> (i32, i32) {
    %c0_i32 = arith.constant 0 : i32
    %c0_i32_0 = arith.constant 0 : i32
    return %arg0, %c0_i32 : i32, i32
  }
  func.func @transform_1(%arg0: i32) -> (i32, i32) {
    %c0_i32 = arith.constant 0 : i32
    %c0_i32_0 = arith.constant 0 : i32
    %c0_i32_1 = arith.constant 0 : i32
    return %c0_i32, %c0_i32_0 : i32, i32
  }
  func.func @transform_2(%arg0: i32) -> (i32, i32) {
    %c0_i32 = arith.constant 0 : i32
    %c0_i32_0 = arith.constant 0 : i32
    %c0_i32_1 = arith.constant 0 : i32
    return %c0_i32, %c0_i32_0 : i32, i32
  }
  func.func @transform_3(%arg0: i32) -> (i32, i32) {
    %c0_i32 = arith.constant 0 : i32
    %c0_i32_0 = arith.constant 0 : i32
    %c0_i32_1 = arith.constant 0 : i32
    return %c0_i32, %c0_i32_0 : i32, i32
  }
  func.func @transform_4(%arg0: i32) -> (i32, i32) {
    %c0_i32 = arith.constant 0 : i32
    %c0_i32_0 = arith.constant 0 : i32
    %c0_i32_1 = arith.constant 0 : i32
    return %c0_i32, %c0_i32_0 : i32, i32
  }
  func.func @transform_5(%arg0: i32) -> (i32, i32) {
    %c0_i32 = arith.constant 0 : i32
    %c0_i32_0 = arith.constant 0 : i32
    %c0_i32_1 = arith.constant 0 : i32
    return %c0_i32, %c0_i32_0 : i32, i32
  }
  func.func @transform_6(%arg0: i32) -> (i32, i32) {
    %c0_i32 = arith.constant 0 : i32
    %c0_i32_0 = arith.constant 0 : i32
    %c0_i32_1 = arith.constant 0 : i32
    return %c0_i32, %c0_i32_0 : i32, i32
  }
  func.func @transform_7(%arg0: i32) -> (i32, i32) {
    %c0_i32 = arith.constant 0 : i32
    %c0_i32_0 = arith.constant 0 : i32
    return %arg0, %c0_i32 : i32, i32
  }
}

</mosaic_0001>

<llo_original>
// kernel: tile.19
$region0: #{tile.19}
  %s0 = inlined_call_operand.vmem [shape: f32[8,64], index: 0, kind: input, shape index: {}]
  %s1 = inlined_call_operand.vmem [shape: f32[1,512], index: 1, kind: output, shape index: {}]
  $region1: #{tile.19} parent=0
    #allocation0 [shape = 'u8[16384]{0}', space=vmem, size = 0x4000, scoped, tag = 'scoped mem for output reshape']
    %v2 = vld [vmem:[%s0] ss:$2 sm:$0xf]
    %vm3 = vcmask 523264
    %4 = vst.msk [vmem:[#allocation0] ss:$8 sm:$0xf] %vm3, %v2
    %s5 = scalar_lea.vmem %s0, 1
    %v6 = vld [vmem:[%s5] ss:$2 sm:$0xf]
    %7 = vrot.lane.b32.xlu0 %v6, 64
    %v8 = vpop.permute.xlu0 %7
    %vm9 = vcmask 1048064
    %10 = vst.msk [vmem:[#allocation0] ss:$8 sm:$0xf] %vm9, %v8
    %s12 = sshll.u32 1, 1
    %s13 = ssub.s32 %s12, 1
    %v15 = vld [vmem:[#allocation0] sm:%s13]
    %s16 = sshll.u32 1, 1
    %s17 = ssub.s32 %s16, 1
    %18 = vst [vmem:[%s1] sm:%s17] %v15
    %s19 = scalar_lea.vmem [#allocation0], 8
    %v20 = vld [vmem:[%s19] sm:%s13]
    %s21 = sshll.u32 1, 1
    %s22 = ssub.s32 %s21, 1
    %s23 = scalar_lea.vmem %s1, 1
    %24 = vst [vmem:[%s23] sm:%s22] %v20
    %s25 = scalar_lea.vmem [#allocation0], 16
    %v26 = vld [vmem:[%s25] sm:%s13]
    %s27 = sshll.u32 1, 1
    %s28 = ssub.s32 %s27, 1
    %s29 = smul.addr 1, 2
    %s30 = scalar_lea.vmem %s1, %s29
    %31 = vst [vmem:[%s30] sm:%s28] %v26
    %s32 = scalar_lea.vmem [#allocation0], 24
    %v33 = vld [vmem:[%s32] sm:%s13]
    %s34 = sshll.u32 1, 1
    %s35 = ssub.s32 %s34, 1
    %s36 = smul.addr 1, 3
    %s37 = scalar_lea.vmem %s1, %s36
    %38 = vst [vmem:[%s37] sm:%s35] %v33

// kernel: tile.18
$region0: #{tile.18}
  #allocation0 [shape = 's32[1]{0}', space=sflag, size = 0x4, scoped, tag = 'scoped memory for tile.18']
  %s0 = inlined_call_operand.vmem [shape: f32[64], index: 0, kind: input, shape index: {}]
  %s1 = inlined_call_operand.vmem [shape: f32[8,64], index: 1, kind: output, shape index: {}]
  // Predicated region
  $region2: #{tile.18} parent=0 // pred_check
    _
  $region3: #{tile.18} parent=0 // pred_check_branch
    %3 = sbr.rel (0) target = $region5
  $region4: #{tile.18} parent=0 // pred_region
    _
  $region5: #{tile.18} parent=0 // pred_fallthru
    _
  %v4 = vld [vmem:[%s0] ss:$0 sm:$0xff]
  %5 = vst [vmem:[%s1] sm:$0xff] %v4

// kernel: tile.23
$region0: #{tile.23}
  #allocation0 [shape = 's32[1]{0}', space=sflag, size = 0x4, scoped, tag = 'scoped memory for tile.23']
  %s0 = inlined_call_operand.vmem [shape: f32[32], index: 0, kind: input, shape index: {}]
  %s1 = inlined_call_operand.vmem [shape: f32[8,32], index: 1, kind: output, shape index: {}]
  // Predicated region
  $region2: #{tile.23} parent=0 // pred_check
    _
  $region3: #{tile.23} parent=0 // pred_check_branch
    %3 = sbr.rel (0) target = $region5
  $region4: #{tile.23} parent=0 // pred_region
    _
  $region5: #{tile.23} parent=0 // pred_fallthru
    _
  %v4 = vld [vmem:[%s0] ss:$0 sm:$0xff]
  %5 = vst [vmem:[%s1] sm:$0xff] %v4

// kernel: tile.24
$region0: #{tile.24}
  %s0 = inlined_call_operand.vmem [shape: f32[8,32], index: 0, kind: input, shape index: {}]
  %s1 = inlined_call_operand.vmem [shape: f32[1,256], index: 1, kind: output, shape index: {}]
  $region1: #{tile.24} parent=0
    #allocation0 [shape = 'u8[8192]{0}', space=vmem, size = 0x2000, scoped, tag = 'scoped mem for output reshape']
    %s2 = smov 3
    %v3 = vld [vmem:[%s0] ss:$4 sm:%s2]
    %vm4 = vcmask 261120
    %5 = vst.msk [vmem:[#allocation0] ss:$8 sm:$0x3] %vm4, %v3
    %s6 = scalar_lea.vmem %s0, 3
    %s7 = smov 3
    %v8 = vld [vmem:[%s6] ss:$4 sm:%s7]
    %9 = vrot.lane.b32.xlu0 %v8, 96
    %v10 = vpop.permute.xlu0 %9
    %vm11 = vcmask 1048320
    %12 = vst.msk [vmem:[#allocation0] ss:$8 sm:$0x3] %vm11, %v10
    %s13 = scalar_lea.vmem %s0, 2
    %s14 = smov 3
    %v15 = vld [vmem:[%s13] ss:$4 sm:%s14]
    %16 = vrot.lane.b32.xlu0 %v15, 64
    %v17 = vpop.permute.xlu0 %16
    %vm18 = vcmask 785920
    %19 = vst.msk [vmem:[#allocation0] ss:$8 sm:$0x3] %vm18, %v17
    %s20 = scalar_lea.vmem %s0, 1
    %s21 = smov 3
    %v22 = vld [vmem:[%s20] ss:$4 sm:%s21]
    %23 = vrot.lane.b32.xlu0 %v22, 32
    %v24 = vpop.permute.xlu0 %23
    %vm25 = vcmask 523520
    %26 = vst.msk [vmem:[#allocation0] ss:$8 sm:$0x3] %vm25, %v24
    %s28 = sshll.u32 1, 1
    %s29 = ssub.s32 %s28, 1
    %v31 = vld [vmem:[#allocation0] sm:%s29]
    %s32 = sshll.u32 1, 1
    %s33 = ssub.s32 %s32, 1
    %34 = vst [vmem:[%s1] sm:%s33] %v31
    %s35 = scalar_lea.vmem [#allocation0], 8
    %v36 = vld [vmem:[%s35] sm:%s29]
    %s37 = sshll.u32 1, 1
    %s38 = ssub.s32 %s37, 1
    %s39 = scalar_lea.vmem %s1, 1
    %40 = vst [vmem:[%s39] sm:%s38] %v36

// kernel: feed_forward_nn.1
$region0: #{feed_forward_nn.1}
  #allocation0 [shape = 'u32[]', space=smem, size = 0x4, offset = 0x4, fixed_abs, tag = 'smem constant byte address 0x4 - core index']
  #allocation1 [shape = 'u32[144,128]{1,0:T(1,128)}', space=vmem, size = 0x12000, scoped, tag = 'internal scratch']
  %s0 = inlined_call_operand.vmem [shape: f32[8,128], index: 0, kind: input, shape index: {}]
  %s1 = inlined_call_operand.vmem [shape: bf16[128,512], index: 1, kind: input, shape index: {}]
  %s2 = inlined_call_operand.vmem [shape: f32[1,512], index: 2, kind: input, shape index: {}]
  %s3 = inlined_call_operand.vmem [shape: bf16[512,256], index: 3, kind: input, shape index: {}]
  %s4 = inlined_call_operand.vmem [shape: f32[1,256], index: 4, kind: input, shape index: {}]
  %s5 = inlined_call_operand.vmem [shape: f32[256,8], index: 5, kind: input, shape index: {}]
  %s6 = inlined_call_operand.vmem [shape: f32[1,8], index: 6, kind: input, shape index: {}]
  %s7 = inlined_call_operand.vmem [shape: f32[8,8], index: 7, kind: output, shape index: {}]
  %s8 = sld [smem:[#allocation0]]
  $region38: #{feed_forward_nn.1} parent=0
    _
  %s10 = ssub.s32 1, %s8
  %s11 = scalar_select 0, %s10, %s8
  // Predicated region
  $region2: #{feed_forward_nn.1} parent=0 // pred_check
    _
  $region3: #{feed_forward_nn.1} parent=0 // pred_check_branch
    %13 = sbr.rel (0) target = $region5
  $region4: #{feed_forward_nn.1} parent=0 // pred_region
    _
  $region5: #{feed_forward_nn.1} parent=0 // pred_fallthru
    _
  // Predicated region
  $region6: #{feed_forward_nn.1} parent=0 // pred_check
    _
  $region7: #{feed_forward_nn.1} parent=0 // pred_check_branch
    %15 = sbr.rel (0) target = $region9
  $region8: #{feed_forward_nn.1} parent=0 // pred_region
    _
  $region9: #{feed_forward_nn.1} parent=0 // pred_fallthru
    _
  // Predicated region
  $region10: #{feed_forward_nn.1} parent=0 // pred_check
    _
  $region11: #{feed_forward_nn.1} parent=0 // pred_check_branch
    %17 = sbr.rel (0) target = $region13
  $region12: #{feed_forward_nn.1} parent=0 // pred_region
    _
  $region13: #{feed_forward_nn.1} parent=0 // pred_fallthru
    _
  // Predicated region
  $region14: #{feed_forward_nn.1} parent=0 // pred_check
    _
  $region15: #{feed_forward_nn.1} parent=0 // pred_check_branch
    %19 = sbr.rel (0) target = $region17
  $region16: #{feed_forward_nn.1} parent=0 // pred_region
    _
  $region17: #{feed_forward_nn.1} parent=0 // pred_fallthru
    _
  // Predicated region
  $region18: #{feed_forward_nn.1} parent=0 // pred_check
    _
  $region19: #{feed_forward_nn.1} parent=0 // pred_check_branch
    %21 = sbr.rel (0) target = $region21
  $region20: #{feed_forward_nn.1} parent=0 // pred_region
    _
  $region21: #{feed_forward_nn.1} parent=0 // pred_fallthru
    _
  // Predicated region
  $region22: #{feed_forward_nn.1} parent=0 // pred_check
    _
  $region23: #{feed_forward_nn.1} parent=0 // pred_check_branch
    %23 = sbr.rel (0) target = $region25
  $region24: #{feed_forward_nn.1} parent=0 // pred_region
    _
  $region25: #{feed_forward_nn.1} parent=0 // pred_fallthru
    _
  // Predicated region
  $region26: #{feed_forward_nn.1} parent=0 // pred_check
    _
  $region27: #{feed_forward_nn.1} parent=0 // pred_check_branch
    %25 = sbr.rel (0) target = $region29
  $region28: #{feed_forward_nn.1} parent=0 // pred_region
    _
  $region29: #{feed_forward_nn.1} parent=0 // pred_fallthru
    _
  %v27 = vld [vmem:[%s1] sm:$0xff]
  %v28 = vld [vmem:[%s1 + $0x8] sm:$0xff]
  %v29 = vld [vmem:[%s1 + $0x10] sm:$0xff]
  %v30 = vld [vmem:[%s1 + $0x18] sm:$0xff]
  %v31 = vld [vmem:[%s1 + $0x20] sm:$0xff]
  %v32 = vld [vmem:[%s1 + $0x28] sm:$0xff]
  %v33 = vld [vmem:[%s1 + $0x30] sm:$0xff]
  %v34 = vld [vmem:[%s1 + $0x38] sm:$0xff]
  %v35 = vld [vmem:[%s1 + $0x40] sm:$0xff]
  %v36 = vld [vmem:[%s1 + $0x48] sm:$0xff]
  %v37 = vld [vmem:[%s1 + $0x50] sm:$0xff]
  %v38 = vld [vmem:[%s1 + $0x58] sm:$0xff]
  %v39 = vld [vmem:[%s1 + $0x60] sm:$0xff]
  %v40 = vld [vmem:[%s1 + $0x68] sm:$0xff]
  %v41 = vld [vmem:[%s1 + $0x70] sm:$0xff]
  %v42 = vld [vmem:[%s1 + $0x78] sm:$0xff]
  %v43 = vld [vmem:[%s1 + $0x80] sm:$0xff]
  %v44 = vld [vmem:[%s1 + $0x88] sm:$0xff]
  %v45 = vld [vmem:[%s1 + $0x90] sm:$0xff]
  %v46 = vld [vmem:[%s1 + $0x98] sm:$0xff]
  %v47 = vld [vmem:[%s1 + $0xa0] sm:$0xff]
  %v48 = vld [vmem:[%s1 + $0xa8] sm:$0xff]
  %v49 = vld [vmem:[%s1 + $0xb0] sm:$0xff]
  %v50 = vld [vmem:[%s1 + $0xb8] sm:$0xff]
  %v51 = vld [vmem:[%s1 + $0xc0] sm:$0xff]
  %v52 = vld [vmem:[%s1 + $0xc8] sm:$0xff]
  %v53 = vld [vmem:[%s1 + $0xd0] sm:$0xff]
  %v54 = vld [vmem:[%s1 + $0xd8] sm:$0xff]
  %v55 = vld [vmem:[%s1 + $0xe0] sm:$0xff]
  %v56 = vld [vmem:[%s1 + $0xe8] sm:$0xff]
  %v57 = vld [vmem:[%s1 + $0xf0] sm:$0xff]
  %v58 = vld [vmem:[%s1 + $0xf8] sm:$0xff]
  %v59 = vld [vmem:[%s3] sm:$0xff]
  %v60 = vld [vmem:[%s3 + $0x8] sm:$0xff]
  %v61 = vld [vmem:[%s3 + $0x10] sm:$0xff]
  %v62 = vld [vmem:[%s3 + $0x18] sm:$0xff]
  %v63 = vld [vmem:[%s3 + $0x20] sm:$0xff]
  %v64 = vld [vmem:[%s3 + $0x28] sm:$0xff]
  %v65 = vld [vmem:[%s3 + $0x30] sm:$0xff]
  %v66 = vld [vmem:[%s3 + $0x38] sm:$0xff]
  %v67 = vld [vmem:[%s3 + $0x40] sm:$0xff]
  %v68 = vld [vmem:[%s3 + $0x48] sm:$0xff]
  %v69 = vld [vmem:[%s3 + $0x50] sm:$0xff]
  %v70 = vld [vmem:[%s3 + $0x58] sm:$0xff]
  %v71 = vld [vmem:[%s3 + $0x60] sm:$0xff]
  %v72 = vld [vmem:[%s3 + $0x68] sm:$0xff]
  %v73 = vld [vmem:[%s3 + $0x70] sm:$0xff]
  %v74 = vld [vmem:[%s3 + $0x78] sm:$0xff]
  %v75 = vld [vmem:[%s3 + $0x80] sm:$0xff]
  %v76 = vld [vmem:[%s3 + $0x88] sm:$0xff]
  %v77 = vld [vmem:[%s3 + $0x90] sm:$0xff]
  %v78 = vld [vmem:[%s3 + $0x98] sm:$0xff]
  %v79 = vld [vmem:[%s3 + $0xa0] sm:$0xff]
  %v80 = vld [vmem:[%s3 + $0xa8] sm:$0xff]
  %v81 = vld [vmem:[%s3 + $0xb0] sm:$0xff]
  %v82 = vld [vmem:[%s3 + $0xb8] sm:$0xff]
  %v83 = vld [vmem:[%s3 + $0xc0] sm:$0xff]
  %v84 = vld [vmem:[%s3 + $0xc8] sm:$0xff]
  %v85 = vld [vmem:[%s3 + $0xd0] sm:$0xff]
  %v86 = vld [vmem:[%s3 + $0xd8] sm:$0xff]
  %v87 = vld [vmem:[%s3 + $0xe0] sm:$0xff]
  %v88 = vld [vmem:[%s3 + $0xe8] sm:$0xff]
  %v89 = vld [vmem:[%s3 + $0xf0] sm:$0xff]
  %v90 = vld [vmem:[%s3 + $0xf8] sm:$0xff]
  %v91 = vld [vmem:[%s3 + $0x100] sm:$0xff]
  %v92 = vld [vmem:[%s3 + $0x108] sm:$0xff]
  %v93 = vld [vmem:[%s3 + $0x110] sm:$0xff]
  %v94 = vld [vmem:[%s3 + $0x118] sm:$0xff]
  %v95 = vld [vmem:[%s3 + $0x120] sm:$0xff]
  %v96 = vld [vmem:[%s3 + $0x128] sm:$0xff]
  %v97 = vld [vmem:[%s3 + $0x130] sm:$0xff]
  %v98 = vld [vmem:[%s3 + $0x138] sm:$0xff]
  %v99 = vld [vmem:[%s3 + $0x140] sm:$0xff]
  %v100 = vld [vmem:[%s3 + $0x148] sm:$0xff]
  %v101 = vld [vmem:[%s3 + $0x150] sm:$0xff]
  %v102 = vld [vmem:[%s3 + $0x158] sm:$0xff]
  %v103 = vld [vmem:[%s3 + $0x160] sm:$0xff]
  %v104 = vld [vmem:[%s3 + $0x168] sm:$0xff]
  %v105 = vld [vmem:[%s3 + $0x170] sm:$0xff]
  %v106 = vld [vmem:[%s3 + $0x178] sm:$0xff]
  %v107 = vld [vmem:[%s3 + $0x180] sm:$0xff]
  %v108 = vld [vmem:[%s3 + $0x188] sm:$0xff]
  %v109 = vld [vmem:[%s3 + $0x190] sm:$0xff]
  %v110 = vld [vmem:[%s3 + $0x198] sm:$0xff]
  %v111 = vld [vmem:[%s3 + $0x1a0] sm:$0xff]
  %v112 = vld [vmem:[%s3 + $0x1a8] sm:$0xff]
  %v113 = vld [vmem:[%s3 + $0x1b0] sm:$0xff]
  %v114 = vld [vmem:[%s3 + $0x1b8] sm:$0xff]
  %v115 = vld [vmem:[%s3 + $0x1c0] sm:$0xff]
  %v116 = vld [vmem:[%s3 + $0x1c8] sm:$0xff]
  %v117 = vld [vmem:[%s3 + $0x1d0] sm:$0xff]
  %v118 = vld [vmem:[%s3 + $0x1d8] sm:$0xff]
  %v119 = vld [vmem:[%s3 + $0x1e0] sm:$0xff]
  %v120 = vld [vmem:[%s3 + $0x1e8] sm:$0xff]
  %v121 = vld [vmem:[%s3 + $0x1f0] sm:$0xff]
  %v122 = vld [vmem:[%s3 + $0x1f8] sm:$0xff]
  %v123 = vld [vmem:[%s5] sm:$0xff]
  %v124 = vld [vmem:[%s5 + $0x8] sm:$0xff]
  %v125 = vld [vmem:[%s5 + $0x10] sm:$0xff]
  %v126 = vld [vmem:[%s5 + $0x18] sm:$0xff]
  %v127 = vld [vmem:[%s5 + $0x20] sm:$0xff]
  %v128 = vld [vmem:[%s5 + $0x28] sm:$0xff]
  %v129 = vld [vmem:[%s5 + $0x30] sm:$0xff]
  %v130 = vld [vmem:[%s5 + $0x38] sm:$0xff]
  %v131 = vld [vmem:[%s5 + $0x40] sm:$0xff]
  %v132 = vld [vmem:[%s5 + $0x48] sm:$0xff]
  %v133 = vld [vmem:[%s5 + $0x50] sm:$0xff]
  %v134 = vld [vmem:[%s5 + $0x58] sm:$0xff]
  %v135 = vld [vmem:[%s5 + $0x60] sm:$0xff]
  %v136 = vld [vmem:[%s5 + $0x68] sm:$0xff]
  %v137 = vld [vmem:[%s5 + $0x70] sm:$0xff]
  %v138 = vld [vmem:[%s5 + $0x78] sm:$0xff]
  %v139 = vld [vmem:[%s5 + $0x80] sm:$0xff]
  %v140 = vld [vmem:[%s5 + $0x88] sm:$0xff]
  %v141 = vld [vmem:[%s5 + $0x90] sm:$0xff]
  %v142 = vld [vmem:[%s5 + $0x98] sm:$0xff]
  %v143 = vld [vmem:[%s5 + $0xa0] sm:$0xff]
  %v144 = vld [vmem:[%s5 + $0xa8] sm:$0xff]
  %v145 = vld [vmem:[%s5 + $0xb0] sm:$0xff]
  %v146 = vld [vmem:[%s5 + $0xb8] sm:$0xff]
  %v147 = vld [vmem:[%s5 + $0xc0] sm:$0xff]
  %v148 = vld [vmem:[%s5 + $0xc8] sm:$0xff]
  %v149 = vld [vmem:[%s5 + $0xd0] sm:$0xff]
  %v150 = vld [vmem:[%s5 + $0xd8] sm:$0xff]
  %v151 = vld [vmem:[%s5 + $0xe0] sm:$0xff]
  %v152 = vld [vmem:[%s5 + $0xe8] sm:$0xff]
  %v153 = vld [vmem:[%s5 + $0xf0] sm:$0xff]
  %v154 = vld [vmem:[%s5 + $0xf8] sm:$0xff]
  %v155 = vld [vmem:[%s2] sm:$0xf]
  %v156 = vld [vmem:[%s4] sm:$0x3]
  %v157 = vld [vmem:[%s6] sm:$0x1]
  %v158 = vld [vmem:[%s0] sm:$0xff]
  %v159 = vpack.c.bf16 %v158, %v158
  %v161 = vlaneseq
  %v162 = vshrl.u32 %v161, 7
  %v163 = vsub.s32 0, %v162
  %v164 = vrot.slane %v155, %v163
  %v165 = vlaneseq
  %v166 = vshrl.u32 %v165, 7
  %v167 = vsub.s32 1, %v166
  %v168 = vrot.slane %v155, %v167
  %v169 = vlaneseq
  %v170 = vshrl.u32 %v169, 7
  %v171 = vsub.s32 2, %v170
  %v172 = vrot.slane %v155, %v171
  %v173 = vlaneseq
  %v174 = vshrl.u32 %v173, 7
  %v175 = vsub.s32 3, %v174
  %v176 = vrot.slane %v155, %v175
  %v213 = vunpack.c.l.b16 %v27
  %v214 = vunpack.c.h.b16 %v27
  %v215 = vunpack.c.l.b16 %v28
  %v216 = vunpack.c.h.b16 %v28
  %v217 = vunpack.c.l.b16 %v29
  %v218 = vunpack.c.h.b16 %v29
  %v219 = vunpack.c.l.b16 %v30
  %v220 = vunpack.c.h.b16 %v30
  %v221 = vunpack.c.l.b16 %v31
  %v222 = vunpack.c.h.b16 %v31
  %v223 = vunpack.c.l.b16 %v32
  %v224 = vunpack.c.h.b16 %v32
  %v225 = vunpack.c.l.b16 %v33
  %v226 = vunpack.c.h.b16 %v33
  %v227 = vunpack.c.l.b16 %v34
  %v228 = vunpack.c.h.b16 %v34
  %v229 = vunpack.c.l.b16 %v35
  %v230 = vunpack.c.h.b16 %v35
  %v231 = vunpack.c.l.b16 %v36
  %v232 = vunpack.c.h.b16 %v36
  %v233 = vunpack.c.l.b16 %v37
  %v234 = vunpack.c.h.b16 %v37
  %v235 = vunpack.c.l.b16 %v38
  %v236 = vunpack.c.h.b16 %v38
  %v237 = vunpack.c.l.b16 %v39
  %v238 = vunpack.c.h.b16 %v39
  %v239 = vunpack.c.l.b16 %v40
  %v240 = vunpack.c.h.b16 %v40
  %v241 = vunpack.c.l.b16 %v41
  %v242 = vunpack.c.h.b16 %v41
  %v243 = vunpack.c.l.b16 %v42
  %v244 = vunpack.c.h.b16 %v42
  %v245 = vunpack.c.l.b16 %v43
  %v246 = vunpack.c.h.b16 %v43
  %v247 = vunpack.c.l.b16 %v44
  %v248 = vunpack.c.h.b16 %v44
  %v249 = vunpack.c.l.b16 %v45
  %v250 = vunpack.c.h.b16 %v45
  %v251 = vunpack.c.l.b16 %v46
  %v252 = vunpack.c.h.b16 %v46
  %v253 = vunpack.c.l.b16 %v47
  %v254 = vunpack.c.h.b16 %v47
  %v255 = vunpack.c.l.b16 %v48
  %v256 = vunpack.c.h.b16 %v48
  %v257 = vunpack.c.l.b16 %v49
  %v258 = vunpack.c.h.b16 %v49
  %v259 = vunpack.c.l.b16 %v50
  %v260 = vunpack.c.h.b16 %v50
  %v261 = vunpack.c.l.b16 %v51
  %v262 = vunpack.c.h.b16 %v51
  %v263 = vunpack.c.l.b16 %v52
  %v264 = vunpack.c.h.b16 %v52
  %v265 = vunpack.c.l.b16 %v53
  %v266 = vunpack.c.h.b16 %v53
  %v267 = vunpack.c.l.b16 %v54
  %v268 = vunpack.c.h.b16 %v54
  %v269 = vunpack.c.l.b16 %v55
  %v270 = vunpack.c.h.b16 %v55
  %v271 = vunpack.c.l.b16 %v56
  %v272 = vunpack.c.h.b16 %v56
  %v273 = vunpack.c.l.b16 %v57
  %v274 = vunpack.c.h.b16 %v57
  %v275 = vunpack.c.l.b16 %v58
  %v276 = vunpack.c.h.b16 %v58
  %v277 = vpack.c.b16 %v217, %v213
  %v278 = vpack.c.b16 %v218, %v214
  %v279 = vpack.c.b16 %v219, %v215
  %v280 = vpack.c.b16 %v220, %v216
  %v281 = vpack.c.b16 %v225, %v221
  %v282 = vpack.c.b16 %v226, %v222
  %v283 = vpack.c.b16 %v227, %v223
  %v284 = vpack.c.b16 %v228, %v224
  %v285 = vpack.c.b16 %v233, %v229
  %v286 = vpack.c.b16 %v234, %v230
  %v287 = vpack.c.b16 %v235, %v231
  %v288 = vpack.c.b16 %v236, %v232
  %v289 = vpack.c.b16 %v241, %v237
  %v290 = vpack.c.b16 %v242, %v238
  %v291 = vpack.c.b16 %v243, %v239
  %v292 = vpack.c.b16 %v244, %v240
  %v293 = vpack.c.b16 %v249, %v245
  %v294 = vpack.c.b16 %v250, %v246
  %v295 = vpack.c.b16 %v251, %v247
  %v296 = vpack.c.b16 %v252, %v248
  %v297 = vpack.c.b16 %v257, %v253
  %v298 = vpack.c.b16 %v258, %v254
  %v299 = vpack.c.b16 %v259, %v255
  %v300 = vpack.c.b16 %v260, %v256
  %v301 = vpack.c.b16 %v265, %v261
  %v302 = vpack.c.b16 %v266, %v262
  %v303 = vpack.c.b16 %v267, %v263
  %v304 = vpack.c.b16 %v268, %v264
  %v305 = vpack.c.b16 %v273, %v269
  %v306 = vpack.c.b16 %v274, %v270
  %v307 = vpack.c.b16 %v275, %v271
  %v308 = vpack.c.b16 %v276, %v272
  %341 = vmatprep.subr.bf16.mxu0 %v306
  %342 = vmatpush1.bf16.msra.mxu0 %v305
  %343 = vmatprep.subr.bf16.mxu0 %v302
  %344 = vmatpush1.bf16.msra.mxu0 %v301
  %345 = vmatprep.subr.bf16.mxu0 %v298
  %346 = vmatpush1.bf16.msra.mxu0 %v297
  %347 = vmatprep.subr.bf16.mxu0 %v294
  %348 = vmatpush1.bf16.msra.mxu0 %v293
  %349 = vmatprep.subr.bf16.mxu0 %v290
  %350 = vmatpush1.bf16.msra.mxu0 %v289
  %351 = vmatprep.subr.bf16.mxu0 %v286
  %352 = vmatpush1.bf16.msra.mxu0 %v285
  %353 = vmatprep.subr.bf16.mxu0 %v282
  %354 = vmatpush1.bf16.msra.mxu0 %v281
  %355 = vmatprep.subr.bf16.mxu0 %v278
  %356 = vmatpush1.bf16.msra.mxu0 %v277
  %357 = vmatprep.subr.bf16.mxu0 0
  %358 = vmatpush2.bf16.msra.mxu0 0
  %359 = vmatprep.subr.bf16.mxu0 0
  %360 = vmatpush2.bf16.msra.mxu0 0
  %361 = vmatprep.subr.bf16.mxu0 0
  %362 = vmatpush2.bf16.msra.mxu0 0
  %363 = vmatprep.subr.bf16.mxu0 0
  %364 = vmatpush2.bf16.msra.mxu0 0
  %365 = vmatprep.subr.bf16.mxu0 0
  %366 = vmatpush2.bf16.msra.mxu0 0
  %367 = vmatprep.subr.bf16.mxu0 0
  %368 = vmatpush2.bf16.msra.mxu0 0
  %369 = vmatprep.subr.bf16.mxu0 0
  %370 = vmatpush2.bf16.msra.mxu0 0
  %371 = vmatprep.subr.bf16.mxu0 0
  %372 = vmatpush2.bf16.msra.mxu0 0
  %373 = vmatprep.mubr.bf16.mxu0 0
  %374 = vmatmul.mubr.bf16.gmra.mxu0 %v159
  %v375 = vpop.f32.mrf.mxu0
  %v376 = vadd.f32 %v164, %v375
  %v377 = vpop.f32.mrf.mxu0
  %v378 = vadd.f32 %v168, %v377
  %v379 = vpop.f32.mrf.mxu0
  %v380 = vpop.f32.mrf.mxu0
  %381 = vdwg.mxu0
  %382 = vmatprep.subr.bf16.mxu0 %v308
  %383 = vmatpush1.bf16.msra.mxu0 %v307
  %384 = vmatprep.subr.bf16.mxu0 %v304
  %385 = vmatpush1.bf16.msra.mxu0 %v303
  %386 = vmatprep.subr.bf16.mxu0 %v300
  %387 = vmatpush1.bf16.msra.mxu0 %v299
  %388 = vmatprep.subr.bf16.mxu0 %v296
  %389 = vmatpush1.bf16.msra.mxu0 %v295
  %390 = vmatprep.subr.bf16.mxu0 %v292
  %391 = vmatpush1.bf16.msra.mxu0 %v291
  %392 = vmatprep.subr.bf16.mxu0 %v288
  %393 = vmatpush1.bf16.msra.mxu0 %v287
  %394 = vmatprep.subr.bf16.mxu0 %v284
  %395 = vmatpush1.bf16.msra.mxu0 %v283
  %396 = vmatprep.subr.bf16.mxu0 %v280
  %397 = vmatpush1.bf16.msra.mxu0 %v279
  %398 = vmatprep.subr.bf16.mxu0 0
  %399 = vmatpush2.bf16.msra.mxu0 0
  %400 = vmatprep.subr.bf16.mxu0 0
  %401 = vmatpush2.bf16.msra.mxu0 0
  %402 = vmatprep.subr.bf16.mxu0 0
  %403 = vmatpush2.bf16.msra.mxu0 0
  %404 = vmatprep.subr.bf16.mxu0 0
  %405 = vmatpush2.bf16.msra.mxu0 0
  %406 = vmatprep.subr.bf16.mxu0 0
  %407 = vmatpush2.bf16.msra.mxu0 0
  %408 = vmatprep.subr.bf16.mxu0 0
  %409 = vmatpush2.bf16.msra.mxu0 0
  %410 = vmatprep.subr.bf16.mxu0 0
  %411 = vmatpush2.bf16.msra.mxu0 0
  %412 = vmatprep.subr.bf16.mxu0 0
  %413 = vmatpush2.bf16.msra.mxu0 0
  %414 = vmatprep.mubr.bf16.mxu0 0
  %415 = vmatmul.mubr.bf16.gmra.mxu0 %v159
  %v416 = vpop.f32.mrf.mxu0
  %v417 = vadd.f32 %v172, %v416
  %v418 = vpop.f32.mrf.mxu0
  %v419 = vadd.f32 %v176, %v418
  %v420 = vpop.f32.mrf.mxu0
  %v421 = vpop.f32.mrf.mxu0
  %422 = vdwg.mxu0
  %v423 = vmax.f32 %v376, 0.0
  %v424 = vmax.f32 %v378, 0.0
  %v425 = vmax.f32 %v417, 0.0
  %v426 = vmax.f32 %v419, 0.0
  %v427 = vpack.c.bf16 %v423, %v423
  %v428 = vpack.c.bf16 %v424, %v424
  %v429 = vpack.c.bf16 %v425, %v425
  %v430 = vpack.c.bf16 %v426, %v426
  %v432 = vlaneseq
  %v433 = vshrl.u32 %v432, 7
  %v434 = vsub.s32 0, %v433
  %v435 = vrot.slane %v156, %v434
  %v436 = vlaneseq
  %v437 = vshrl.u32 %v436, 7
  %v438 = vsub.s32 1, %v437
  %v439 = vrot.slane %v156, %v438
  %v506 = vunpack.c.l.b16 %v59
  %v507 = vunpack.c.h.b16 %v59
  %v508 = vunpack.c.l.b16 %v60
  %v509 = vunpack.c.h.b16 %v60
  %v510 = vunpack.c.l.b16 %v61
  %v511 = vunpack.c.h.b16 %v61
  %v512 = vunpack.c.l.b16 %v62
  %v513 = vunpack.c.h.b16 %v62
  %v514 = vunpack.c.l.b16 %v63
  %v515 = vunpack.c.h.b16 %v63
  %v516 = vunpack.c.l.b16 %v64
  %v517 = vunpack.c.h.b16 %v64
  %v518 = vunpack.c.l.b16 %v65
  %v519 = vunpack.c.h.b16 %v65
  %v520 = vunpack.c.l.b16 %v66
  %v521 = vunpack.c.h.b16 %v66
  %v522 = vunpack.c.l.b16 %v67
  %v523 = vunpack.c.h.b16 %v67
  %v524 = vunpack.c.l.b16 %v68
  %v525 = vunpack.c.h.b16 %v68
  %v526 = vunpack.c.l.b16 %v69
  %v527 = vunpack.c.h.b16 %v69
  %v528 = vunpack.c.l.b16 %v70
  %v529 = vunpack.c.h.b16 %v70
  %v530 = vunpack.c.l.b16 %v71
  %v531 = vunpack.c.h.b16 %v71
  %v532 = vunpack.c.l.b16 %v72
  %v533 = vunpack.c.h.b16 %v72
  %v534 = vunpack.c.l.b16 %v73
  %v535 = vunpack.c.h.b16 %v73
  %v536 = vunpack.c.l.b16 %v74
  %v537 = vunpack.c.h.b16 %v74
  %v538 = vunpack.c.l.b16 %v75
  %v539 = vunpack.c.h.b16 %v75
  %v540 = vunpack.c.l.b16 %v76
  %v541 = vunpack.c.h.b16 %v76
  %v542 = vunpack.c.l.b16 %v77
  %v543 = vunpack.c.h.b16 %v77
  %v544 = vunpack.c.l.b16 %v78
  %v545 = vunpack.c.h.b16 %v78
  %v546 = vunpack.c.l.b16 %v79
  %v547 = vunpack.c.h.b16 %v79
  %v548 = vunpack.c.l.b16 %v80
  %v549 = vunpack.c.h.b16 %v80
  %v550 = vunpack.c.l.b16 %v81
  %v551 = vunpack.c.h.b16 %v81
  %v552 = vunpack.c.l.b16 %v82
  %v553 = vunpack.c.h.b16 %v82
  %v554 = vunpack.c.l.b16 %v83
  %v555 = vunpack.c.h.b16 %v83
  %v556 = vunpack.c.l.b16 %v84
  %v557 = vunpack.c.h.b16 %v84
  %v558 = vunpack.c.l.b16 %v85
  %v559 = vunpack.c.h.b16 %v85
  %v560 = vunpack.c.l.b16 %v86
  %v561 = vunpack.c.h.b16 %v86
  %v562 = vunpack.c.l.b16 %v87
  %v563 = vunpack.c.h.b16 %v87
  %v564 = vunpack.c.l.b16 %v88
  %v565 = vunpack.c.h.b16 %v88
  %v566 = vunpack.c.l.b16 %v89
  %v567 = vunpack.c.h.b16 %v89
  %v568 = vunpack.c.l.b16 %v90
  %v569 = vunpack.c.h.b16 %v90
  %v570 = vunpack.c.l.b16 %v91
  %v571 = vunpack.c.h.b16 %v91
  %v572 = vunpack.c.l.b16 %v92
  %v573 = vunpack.c.h.b16 %v92
  %v574 = vunpack.c.l.b16 %v93
  %v575 = vunpack.c.h.b16 %v93
  %v576 = vunpack.c.l.b16 %v94
  %v577 = vunpack.c.h.b16 %v94
  %v578 = vunpack.c.l.b16 %v95
  %v579 = vunpack.c.h.b16 %v95
  %v580 = vunpack.c.l.b16 %v96
  %v581 = vunpack.c.h.b16 %v96
  %v582 = vunpack.c.l.b16 %v97
  %v583 = vunpack.c.h.b16 %v97
  %v584 = vunpack.c.l.b16 %v98
  %v585 = vunpack.c.h.b16 %v98
  %v586 = vunpack.c.l.b16 %v99
  %v587 = vunpack.c.h.b16 %v99
  %v588 = vunpack.c.l.b16 %v100
  %v589 = vunpack.c.h.b16 %v100
  %v590 = vunpack.c.l.b16 %v101
  %v591 = vunpack.c.h.b16 %v101
  %v592 = vunpack.c.l.b16 %v102
  %v593 = vunpack.c.h.b16 %v102
  %v594 = vunpack.c.l.b16 %v103
  %v595 = vunpack.c.h.b16 %v103
  %v596 = vunpack.c.l.b16 %v104
  %v597 = vunpack.c.h.b16 %v104
  %v598 = vunpack.c.l.b16 %v105
  %v599 = vunpack.c.h.b16 %v105
  %v600 = vunpack.c.l.b16 %v106
  %v601 = vunpack.c.h.b16 %v106
  %v602 = vunpack.c.l.b16 %v107
  %v603 = vunpack.c.h.b16 %v107
  %v604 = vunpack.c.l.b16 %v108
  %v605 = vunpack.c.h.b16 %v108
  %v606 = vunpack.c.l.b16 %v109
  %v607 = vunpack.c.h.b16 %v109
  %v608 = vunpack.c.l.b16 %v110
  %v609 = vunpack.c.h.b16 %v110
  %v610 = vunpack.c.l.b16 %v111
  %v611 = vunpack.c.h.b16 %v111
  %v612 = vunpack.c.l.b16 %v112
  %v613 = vunpack.c.h.b16 %v112
  %v614 = vunpack.c.l.b16 %v113
  %v615 = vunpack.c.h.b16 %v113
  %v616 = vunpack.c.l.b16 %v114
  %v617 = vunpack.c.h.b16 %v114
  %v618 = vunpack.c.l.b16 %v115
  %v619 = vunpack.c.h.b16 %v115
  %v620 = vunpack.c.l.b16 %v116
  %v621 = vunpack.c.h.b16 %v116
  %v622 = vunpack.c.l.b16 %v117
  %v623 = vunpack.c.h.b16 %v117
  %v624 = vunpack.c.l.b16 %v118
  %v625 = vunpack.c.h.b16 %v118
  %v626 = vunpack.c.l.b16 %v119
  %v627 = vunpack.c.h.b16 %v119
  %v628 = vunpack.c.l.b16 %v120
  %v629 = vunpack.c.h.b16 %v120
  %v630 = vunpack.c.l.b16 %v121
  %v631 = vunpack.c.h.b16 %v121
  %v632 = vunpack.c.l.b16 %v122
  %v633 = vunpack.c.h.b16 %v122
  %v634 = vpack.c.b16 %v508, %v506
  %v635 = vpack.c.b16 %v509, %v507
  %v636 = vpack.c.b16 %v512, %v510
  %v637 = vpack.c.b16 %v513, %v511
  %v638 = vpack.c.b16 %v516, %v514
  %v639 = vpack.c.b16 %v517, %v515
  %v640 = vpack.c.b16 %v520, %v518
  %v641 = vpack.c.b16 %v521, %v519
  %v642 = vpack.c.b16 %v524, %v522
  %v643 = vpack.c.b16 %v525, %v523
  %v644 = vpack.c.b16 %v528, %v526
  %v645 = vpack.c.b16 %v529, %v527
  %v646 = vpack.c.b16 %v532, %v530
  %v647 = vpack.c.b16 %v533, %v531
  %v648 = vpack.c.b16 %v536, %v534
  %v649 = vpack.c.b16 %v537, %v535
  %v650 = vpack.c.b16 %v540, %v538
  %v651 = vpack.c.b16 %v541, %v539
  %v652 = vpack.c.b16 %v544, %v542
  %v653 = vpack.c.b16 %v545, %v543
  %v654 = vpack.c.b16 %v548, %v546
  %v655 = vpack.c.b16 %v549, %v547
  %v656 = vpack.c.b16 %v552, %v550
  %v657 = vpack.c.b16 %v553, %v551
  %v658 = vpack.c.b16 %v556, %v554
  %v659 = vpack.c.b16 %v557, %v555
  %v660 = vpack.c.b16 %v560, %v558
  %v661 = vpack.c.b16 %v561, %v559
  %v662 = vpack.c.b16 %v564, %v562
  %v663 = vpack.c.b16 %v565, %v563
  %v664 = vpack.c.b16 %v568, %v566
  %v665 = vpack.c.b16 %v569, %v567
  %v666 = vpack.c.b16 %v572, %v570
  %v667 = vpack.c.b16 %v573, %v571
  %v668 = vpack.c.b16 %v576, %v574
  %v669 = vpack.c.b16 %v577, %v575
  %v670 = vpack.c.b16 %v580, %v578
  %v671 = vpack.c.b16 %v581, %v579
  %v672 = vpack.c.b16 %v584, %v582
  %v673 = vpack.c.b16 %v585, %v583
  %v674 = vpack.c.b16 %v588, %v586
  %v675 = vpack.c.b16 %v589, %v587
  %v676 = vpack.c.b16 %v592, %v590
  %v677 = vpack.c.b16 %v593, %v591
  %v678 = vpack.c.b16 %v596, %v594
  %v679 = vpack.c.b16 %v597, %v595
  %v680 = vpack.c.b16 %v600, %v598
  %v681 = vpack.c.b16 %v601, %v599
  %v682 = vpack.c.b16 %v604, %v602
  %v683 = vpack.c.b16 %v605, %v603
  %v684 = vpack.c.b16 %v608, %v606
  %v685 = vpack.c.b16 %v609, %v607
  %v686 = vpack.c.b16 %v612, %v610
  %v687 = vpack.c.b16 %v613, %v611
  %v688 = vpack.c.b16 %v616, %v614
  %v689 = vpack.c.b16 %v617, %v615
  %v690 = vpack.c.b16 %v620, %v618
  %v691 = vpack.c.b16 %v621, %v619
  %v692 = vpack.c.b16 %v624, %v622
  %v693 = vpack.c.b16 %v625, %v623
  %v694 = vpack.c.b16 %v628, %v626
  %v695 = vpack.c.b16 %v629, %v627
  %v696 = vpack.c.b16 %v632, %v630
  %v697 = vpack.c.b16 %v633, %v631
  %762 = vmatprep.subr.bf16.mxu0 %v649
  %763 = vmatpush1.bf16.msra.mxu0 %v648
  %764 = vmatprep.subr.bf16.mxu0 %v647
  %765 = vmatpush1.bf16.msra.mxu0 %v646
  %766 = vmatprep.subr.bf16.mxu0 %v645
  %767 = vmatpush1.bf16.msra.mxu0 %v644
  %768 = vmatprep.subr.bf16.mxu0 %v643
  %769 = vmatpush1.bf16.msra.mxu0 %v642
  %770 = vmatprep.subr.bf16.mxu0 %v641
  %771 = vmatpush1.bf16.msra.mxu0 %v640
  %772 = vmatprep.subr.bf16.mxu0 %v639
  %773 = vmatpush1.bf16.msra.mxu0 %v638
  %774 = vmatprep.subr.bf16.mxu0 %v637
  %775 = vmatpush1.bf16.msra.mxu0 %v636
  %776 = vmatprep.subr.bf16.mxu0 %v635
  %777 = vmatpush1.bf16.msra.mxu0 %v634
  %778 = vmatprep.subr.bf16.mxu0 %v665
  %779 = vmatpush2.bf16.msra.mxu0 %v664
  %780 = vmatprep.subr.bf16.mxu0 %v663
  %781 = vmatpush2.bf16.msra.mxu0 %v662
  %782 = vmatprep.subr.bf16.mxu0 %v661
  %783 = vmatpush2.bf16.msra.mxu0 %v660
  %784 = vmatprep.subr.bf16.mxu0 %v659
  %785 = vmatpush2.bf16.msra.mxu0 %v658
  %786 = vmatprep.subr.bf16.mxu0 %v657
  %787 = vmatpush2.bf16.msra.mxu0 %v656
  %788 = vmatprep.subr.bf16.mxu0 %v655
  %789 = vmatpush2.bf16.msra.mxu0 %v654
  %790 = vmatprep.subr.bf16.mxu0 %v653
  %791 = vmatpush2.bf16.msra.mxu0 %v652
  %792 = vmatprep.subr.bf16.mxu0 %v651
  %793 = vmatpush2.bf16.msra.mxu0 %v650
  %794 = vmatprep.mubr.bf16.mxu0 %v428
  %795 = vmatmul.mubr.bf16.gmra.mxu0 %v427
  %v796 = vpop.f32.mrf.mxu0
  %v797 = vadd.f32 %v435, %v796
  %v798 = vpop.f32.mrf.mxu0
  %v799 = vadd.f32 %v439, %v798
  %v800 = vpop.f32.mrf.mxu0
  %v801 = vpop.f32.mrf.mxu0
  %802 = vdwg.mxu0
  %803 = vmatprep.subr.bf16.mxu0 %v681
  %804 = vmatpush1.bf16.msra.mxu0 %v680
  %805 = vmatprep.subr.bf16.mxu0 %v679
  %806 = vmatpush1.bf16.msra.mxu0 %v678
  %807 = vmatprep.subr.bf16.mxu0 %v677
  %808 = vmatpush1.bf16.msra.mxu0 %v676
  %809 = vmatprep.subr.bf16.mxu0 %v675
  %810 = vmatpush1.bf16.msra.mxu0 %v674
  %811 = vmatprep.subr.bf16.mxu0 %v673
  %812 = vmatpush1.bf16.msra.mxu0 %v672
  %813 = vmatprep.subr.bf16.mxu0 %v671
  %814 = vmatpush1.bf16.msra.mxu0 %v670
  %815 = vmatprep.subr.bf16.mxu0 %v669
  %816 = vmatpush1.bf16.msra.mxu0 %v668
  %817 = vmatprep.subr.bf16.mxu0 %v667
  %818 = vmatpush1.bf16.msra.mxu0 %v666
  %819 = vmatprep.subr.bf16.mxu0 %v697
  %820 = vmatpush2.bf16.msra.mxu0 %v696
  %821 = vmatprep.subr.bf16.mxu0 %v695
  %822 = vmatpush2.bf16.msra.mxu0 %v694
  %823 = vmatprep.subr.bf16.mxu0 %v693
  %824 = vmatpush2.bf16.msra.mxu0 %v692
  %825 = vmatprep.subr.bf16.mxu0 %v691
  %826 = vmatpush2.bf16.msra.mxu0 %v690
  %827 = vmatprep.subr.bf16.mxu0 %v689
  %828 = vmatpush2.bf16.msra.mxu0 %v688
  %829 = vmatprep.subr.bf16.mxu0 %v687
  %830 = vmatpush2.bf16.msra.mxu0 %v686
  %831 = vmatprep.subr.bf16.mxu0 %v685
  %832 = vmatpush2.bf16.msra.mxu0 %v684
  %833 = vmatprep.subr.bf16.mxu0 %v683
  %834 = vmatpush2.bf16.msra.mxu0 %v682
  %835 = vmatprep.mubr.bf16.mxu0 %v430
  %836 = vmatmul.mubr.bf16.gmra.mxu0 %v429
  %v837 = vpop.f32.mrf.mxu0
  %v838 = vadd.f32 %v797, %v837
  %v839 = vpop.f32.mrf.mxu0
  %v840 = vadd.f32 %v799, %v839
  %v841 = vpop.f32.mrf.mxu0
  %v842 = vpop.f32.mrf.mxu0
  %843 = vdwg.mxu0
  %v844 = vmax.f32 %v838, 0.0
  %v845 = vmax.f32 %v840, 0.0
  %v847 = vlaneseq
  %v848 = vshrl.u32 %v847, 7
  %v849 = vsub.s32 0, %v848
  %v850 = vrot.slane %v157, %v849
  %852 = vmatprep.subr.mxu0 0.0
  %853 = vmatpush1.msra.mxu0 %v138
  %854 = vmatprep.subr.mxu0 0.0
  %855 = vmatpush1.msra.mxu0 %v137
  %856 = vmatprep.subr.mxu0 0.0
  %857 = vmatpush1.msra.mxu0 %v136
  %858 = vmatprep.subr.mxu0 0.0
  %859 = vmatpush1.msra.mxu0 %v135
  %860 = vmatprep.subr.mxu0 0.0
  %861 = vmatpush1.msra.mxu0 %v134
  %862 = vmatprep.subr.mxu0 0.0
  %863 = vmatpush1.msra.mxu0 %v133
  %864 = vmatprep.subr.mxu0 0.0
  %865 = vmatpush1.msra.mxu0 %v132
  %866 = vmatprep.subr.mxu0 0.0
  %867 = vmatpush1.msra.mxu0 %v131
  %868 = vmatprep.subr.mxu0 0.0
  %869 = vmatpush1.msra.mxu0 %v130
  %870 = vmatprep.subr.mxu0 0.0
  %871 = vmatpush1.msra.mxu0 %v129
  %872 = vmatprep.subr.mxu0 0.0
  %873 = vmatpush1.msra.mxu0 %v128
  %874 = vmatprep.subr.mxu0 0.0
  %875 = vmatpush1.msra.mxu0 %v127
  %876 = vmatprep.subr.mxu0 0.0
  %877 = vmatpush1.msra.mxu0 %v126
  %878 = vmatprep.subr.mxu0 0.0
  %879 = vmatpush1.msra.mxu0 %v125
  %880 = vmatprep.subr.mxu0 0.0
  %881 = vmatpush1.msra.mxu0 %v124
  %882 = vmatprep.subr.mxu0 0.0
  %883 = vmatpush1.msra.mxu0 %v123
  %884 = vmatprep.subr.mxu0 0.0
  %885 = vmatpush2.msra.mxu0 %v154
  %886 = vmatprep.subr.mxu0 0.0
  %887 = vmatpush2.msra.mxu0 %v153
  %888 = vmatprep.subr.mxu0 0.0
  %889 = vmatpush2.msra.mxu0 %v152
  %890 = vmatprep.subr.mxu0 0.0
  %891 = vmatpush2.msra.mxu0 %v151
  %892 = vmatprep.subr.mxu0 0.0
  %893 = vmatpush2.msra.mxu0 %v150
  %894 = vmatprep.subr.mxu0 0.0
  %895 = vmatpush2.msra.mxu0 %v149
  %896 = vmatprep.subr.mxu0 0.0
  %897 = vmatpush2.msra.mxu0 %v148
  %898 = vmatprep.subr.mxu0 0.0
  %899 = vmatpush2.msra.mxu0 %v147
  %900 = vmatprep.subr.mxu0 0.0
  %901 = vmatpush2.msra.mxu0 %v146
  %902 = vmatprep.subr.mxu0 0.0
  %903 = vmatpush2.msra.mxu0 %v145
  %904 = vmatprep.subr.mxu0 0.0
  %905 = vmatpush2.msra.mxu0 %v144
  %906 = vmatprep.subr.mxu0 0.0
  %907 = vmatpush2.msra.mxu0 %v143
  %908 = vmatprep.subr.mxu0 0.0
  %909 = vmatpush2.msra.mxu0 %v142
  %910 = vmatprep.subr.mxu0 0.0
  %911 = vmatpush2.msra.mxu0 %v141
  %912 = vmatprep.subr.mxu0 0.0
  %913 = vmatpush2.msra.mxu0 %v140
  %914 = vmatprep.subr.mxu0 0.0
  %915 = vmatpush2.msra.mxu0 %v139
  %916 = vmatprep.mubr.f32.mxu0 %v845
  %917 = vmatmul.mubr.f32.gmra.mxu0 %v844
  %v918 = vpop.f32.mrf.mxu0
  %v919 = vadd.f32 %v850, %v918
  %v920 = vpop.f32.mrf.mxu0
  %921 = vdwg.mxu0
  %v922 = vsub.f32 0.0, %v919
  %v923 = vmul.f32 %v922, 1.442695
  %v924 = vpow.pop %v923
  %v925 = vadd.f32 %v924, 1.0
  %v926 = vrcp.pop %v925
  %v927 = vmul.f32 1.0, %v926
  %vm928 = vcmask 64512
  %929 = vst.msk [vmem:[%s7] sm:$0xff] %vm928, %v927
  // Predicated region
  $region30: #{feed_forward_nn.1} parent=0 // pred_check
    _
  $region31: #{feed_forward_nn.1} parent=0 // pred_check_branch
    %931 = sbr.rel (0) target = $region33
  $region32: #{feed_forward_nn.1} parent=0 // pred_region
    _
  $region33: #{feed_forward_nn.1} parent=0 // pred_fallthru
    _
  // Predicated region
  $region34: #{feed_forward_nn.1} parent=0 // pred_check
    _
  $region35: #{feed_forward_nn.1} parent=0 // pred_check_branch
    %933 = sbr.rel (0) target = $region37
  $region36: #{feed_forward_nn.1} parent=0 // pred_region
    _
  $region37: #{feed_forward_nn.1} parent=0 // pred_fallthru
    _

</llo_original>
